<compile_context>
chip_gen: v5e
topology: v5e:2x2
jax: 0.10.0
libtpu: 0.0.40
codegen_flags: <defaults>
</compile_context>

<pallas_src>
import jax
import jax.numpy as jnp
from jax.experimental import pallas as pl
from jax.experimental.pallas import tpu as pltpu


# --------------------------------------------------------------------------
# Kernel
# --------------------------------------------------------------------------
def _decoder_decode_kernel(x0_ref, h0_ref, c0_ref,
                           w0_ref, b0_ref, wrec_ref, brec_ref,
                           wfc_ref, bfc_ref,
                           pred_ref, h_out_ref, c_out_ref):
    """Full T-step decode in one invocation.

    x0_ref:   (B, O)      initial decoder input
    h0_ref:   (B, H)      initial hidden state
    c0_ref:   (B, H)      initial cell state
    w0_ref:   (O+H, 4H)   stacked [Wih^T ; Whh^T], i/f/o columns pre-scaled 0.5
    b0_ref:   (1, 4H)     (b_ih + b_hh), i/f/o lanes pre-scaled 0.5
    wrec_ref: (H, 4H)     Wfc^T @ Wih^T + Whh^T, i/f/o columns pre-scaled 0.5
    brec_ref: (1, 4H)     b_fc @ Wih^T + b_ih + b_hh, i/f/o lanes pre-scaled 0.5
    wfc_ref:  (H, O)      Wfc^T
    bfc_ref:  (1, O)      b_fc
    pred_ref: (B, T*O)    lane-dense prediction slab (step t -> lanes [t*O,(t+1)*O))
    h_out_ref/c_out_ref: (B, H) final state
    """
    B, O = x0_ref.shape
    H = h0_ref.shape[-1]
    T = pred_ref.shape[-1] // O

    # Hoisted once: gate-lane mask (g gate = lanes [2H, 3H)).
    lane = jax.lax.broadcasted_iota(jnp.int32, (B, 4 * H), 1)
    g_lanes = (lane >= 2 * H) & (lane < 3 * H)

    def cell_step(gates_half, c):
        # gates_half holds z for the g gate and z/2 for i/f/o (pre-scaled
        # weights), so ONE tanh pass gives tanh(z) / tanh(z/2) and
        # sigmoid(z) = 0.5*tanh(z/2) + 0.5 is a single FMA+select fixup.
        t_act = jnp.tanh(gates_half)
        a = jnp.where(g_lanes, t_act, 0.5 * t_act + 0.5)
        i_g = a[:, 0 * H:1 * H]
        f_g = a[:, 1 * H:2 * H]
        g_g = a[:, 2 * H:3 * H]
        o_g = a[:, 3 * H:4 * H]
        c_new = f_g * c + i_g * g_g
        h_new = o_g * jnp.tanh(c_new)
        return h_new, c_new

    wrec = wrec_ref[...]
    brec = brec_ref[...]
    wfc = wfc_ref[...]
    bfc = bfc_ref[...]

    # ---- step 0: original x0 @ Wih^T path (sublane-aligned slices) ----
    h = h0_ref[...]
    c = c0_ref[...]
    gates = (jnp.dot(x0_ref[...], w0_ref[:O, :], preferred_element_type=jnp.float32)
             + jnp.dot(h, w0_ref[O:, :], preferred_element_type=jnp.float32)
             + b0_ref[...])
    h, c = cell_step(gates, c)
    pred_ref[:, 0:O] = jnp.dot(h, wfc, preferred_element_type=jnp.float32) + bfc

    # ---- steps 1..T-1: fc head folded in -> one dependent matmul per step ----
    for t in range(1, T):  # static unroll; tiny live set (few vregs per step)
        gates = jnp.dot(h, wrec, preferred_element_type=jnp.float32) + brec
        h, c = cell_step(gates, c)
        # prediction is off the h -> gates -> h critical path
        pred_ref[:, t * O:(t + 1) * O] = (
            jnp.dot(h, wfc, preferred_element_type=jnp.float32) + bfc)

    h_out_ref[...] = h
    c_out_ref[...] = c


# --------------------------------------------------------------------------
# Wrappers
# --------------------------------------------------------------------------
def prepare_params(params):
    """One-time parameter prep, hoisted out of the decode path.

    - transposes + bias fuse
    - fold fc head into the recurrence weight/bias
    - pre-scale i/f/o columns by 0.5 (sigmoid-via-tanh single-EUP-pass trick)
    """
    O = params["w_ih"].shape[1]
    H = params["w_hh"].shape[1]
    w_ih_t = params["w_ih"].T          # (O, 4H)
    w_hh_t = params["w_hh"].T          # (H, 4H)
    w_fc_t = params["w_fc"].T          # (H, O)
    b = params["b_ih"] + params["b_hh"]            # (4H,)
    w_rec = w_fc_t @ w_ih_t + w_hh_t               # (H, 4H)
    b_rec = params["b_fc"] @ w_ih_t + b            # (4H,)

    col = jnp.arange(4 * H)
    scale = jnp.where((col >= 2 * H) & (col < 3 * H), 1.0, 0.5).astype(jnp.float32)

    return {
        "w0_s": jnp.concatenate([w_ih_t, w_hh_t], axis=0) * scale,   # (O+H, 4H)
        "b0_s": (b * scale)[None, :],                                 # (1, 4H)
        "w_rec_s": w_rec * scale,                                     # (H, 4H)
        "b_rec_s": (b_rec * scale)[None, :],                          # (1, 4H)
        "w_fc_t": w_fc_t,                                             # (H, O)
        "b_fc": params["b_fc"][None, :],                              # (1, O)
    }


def decoder_decode(x, hidden, cell, prepped, num_steps):
    """Fused T-step autoregressive decode (prediction fed back as next input).

    x: (B, 1, O); hidden, cell: (1, B, H).
    Returns (preds (T, B, O), hidden (1, B, H), cell (1, B, H)).
    """
    B, S, O = x.shape
    assert S == 1, "decoder consumes one step at a time (output.squeeze(1))"
    H = hidden.shape[-1]
    T = int(num_steps)

    x2d = x[:, 0, :]
    h2d = hidden[0]
    c2d = cell[0]

    vmem = lambda: pl.BlockSpec(memory_space=pltpu.MemorySpace.VMEM)

    flops = (2 * B * (O + H) * 4 * H + 2 * B * H * O
             + (T - 1) * (2 * B * H * 4 * H + 2 * B * H * O))
    transcendentals = T * (B * 4 * H + B * H)
    bytes_accessed = 4 * ((O + H) * 4 * H + H * 4 * H + 2 * 4 * H + H * O + O
                          + B * O + 2 * B * H           # state in
                          + 2 * B * H + B * T * O)      # state + preds out

    pred_slab, h_new, c_new = pl.pallas_call(
        _decoder_decode_kernel,
        in_specs=[vmem() for _ in range(9)],
        out_specs=(vmem(), vmem(), vmem()),
        out_shape=(
            jax.ShapeDtypeStruct((B, T * O), jnp.float32),   # lane-dense slab
            jax.ShapeDtypeStruct((B, H), jnp.float32),
            jax.ShapeDtypeStruct((B, H), jnp.float32),
        ),
        cost_estimate=pl.CostEstimate(
            flops=flops,
            transcendentals=transcendentals,
            bytes_accessed=bytes_accessed),
    )(x2d, h2d, c2d, prepped["w0_s"], prepped["b0_s"],
      prepped["w_rec_s"], prepped["b_rec_s"], prepped["w_fc_t"], prepped["b_fc"])

    # (B, T*O) lane-dense slab -> (T, B, O)
    preds = pred_slab.reshape(B, T, O).transpose(1, 0, 2)
    return preds, h_new[None, :, :], c_new[None, :, :]


def decoder_forward(x, hidden, cell, prepped):
    """Exactly the PyTorch Decoder.forward: one LSTM step + fc projection."""
    preds, h_new, c_new = decoder_decode(x, hidden, cell, prepped, num_steps=1)
    return preds[0], h_new, c_new


# --------------------------------------------------------------------------
# Pure-JAX reference (mirrors torch.nn.LSTM one layer + Linear)
# --------------------------------------------------------------------------
def _lstm_step_ref(x2d, h, c, params):
    H = h.shape[-1]
    gates = (x2d @ params["w_ih"].T + params["b_ih"]
             + h @ params["w_hh"].T + params["b_hh"])
    i_g = jax.nn.sigmoid(gates[:, 0 * H:1 * H])
    f_g = jax.nn.sigmoid(gates[:, 1 * H:2 * H])
    g_g = jnp.tanh(gates[:, 2 * H:3 * H])
    o_g = jax.nn.sigmoid(gates[:, 3 * H:4 * H])
    c_new = f_g * c + i_g * g_g
    h_new = o_g * jnp.tanh(c_new)
    pred = h_new @ params["w_fc"].T + params["b_fc"]
    return pred, h_new, c_new


def decoder_forward_ref(x, hidden, cell, params):
    pred, h_new, c_new = _lstm_step_ref(x[:, 0, :], hidden[0], cell[0], params)
    return pred, h_new[None], c_new[None]


def decoder_decode_ref(x, hidden, cell, params, num_steps):
    x2d, h, c = x[:, 0, :], hidden[0], cell[0]
    preds = []
    for _ in range(num_steps):
        pred, h, c = _lstm_step_ref(x2d, h, c, params)
        preds.append(pred)
        x2d = pred
    return jnp.stack(preds), h[None], c[None]


def init_params(key, output_dim, hidden_dim):
    """Deterministic init matching the PyTorch module's parameter shapes."""
    ks = jax.random.split(key, 6)
    bound = 1.0 / jnp.sqrt(hidden_dim)
    u = lambda k, shape: jax.random.uniform(k, shape, jnp.float32, -bound, bound)
    return {
        "w_ih": u(ks[0], (4 * hidden_dim, output_dim)),
        "w_hh": u(ks[1], (4 * hidden_dim, hidden_dim)),
        "b_ih": u(ks[2], (4 * hidden_dim,)),
        "b_hh": u(ks[3], (4 * hidden_dim,)),
        "w_fc": u(ks[4], (output_dim, hidden_dim)),
        "b_fc": u(ks[5], (output_dim,)),
    }


if __name__ == "__main__":
    B, O, H = 8, 16, 32   # batch, output_dim, hidden_dim; num_layers=1, seq=1
    T = 8                 # fused autoregressive decode steps -> (8, 128) slab

    key = jax.random.PRNGKey(0)
    k_x, k_h, k_c, k_p = jax.random.split(key, 4)

    x = jax.random.normal(k_x, (B, 1, O), jnp.float32)        # (batch, seq=1, output_dim)
    hidden = jax.random.normal(k_h, (1, B, H), jnp.float32)   # (num_layers, batch, hidden)
    cell = jax.random.normal(k_c, (1, B, H), jnp.float32)
    params = init_params(k_p, O, H)
    prepped = prepare_params(params)   # one-time prep: transposes, fc fold, 0.5 gate scaling

    # --- single step: exactly the module's forward(x, hidden, cell) ---
    pred, h1, c1 = decoder_forward(x, hidden, cell, prepped)
    jax.block_until_ready((pred, h1, c1))
    pred_r, h1_r, c1_r = decoder_forward_ref(x, hidden, cell, params)
    assert pred.shape == (B, O) and h1.shape == (1, B, H) and c1.shape == (1, B, H)
    assert jnp.allclose(pred, pred_r, atol=1e-5, rtol=1e-5)
    assert jnp.allclose(h1, h1_r, atol=1e-5, rtol=1e-5)
    assert jnp.allclose(c1, c1_r, atol=1e-5, rtol=1e-5)

    # --- fused T-step autoregressive decode (one pallas_call, no grid) ---
    preds, hT, cT = decoder_decode(x, hidden, cell, prepped, num_steps=T)
    jax.block_until_ready((preds, hT, cT))
    preds_r, hT_r, cT_r = decoder_decode_ref(x, hidden, cell, params, num_steps=T)
    assert preds.shape == (T, B, O)
    assert jnp.allclose(preds, preds_r, atol=1e-4, rtol=1e-4)
    assert jnp.allclose(hT, hT_r, atol=1e-4, rtol=1e-4)
    assert jnp.allclose(cT, cT_r, atol=1e-4, rtol=1e-4)

    print("KERNEL_OK")
</pallas_src>

<mosaic_0001>
module attributes {stable_mosaic.version = 11 : i64} {
  func.func @_decoder_decode_kernel(%arg0: memref<8x16xf32, #tpu.memory_space<vmem>>, %arg1: memref<8x32xf32, #tpu.memory_space<vmem>>, %arg2: memref<8x32xf32, #tpu.memory_space<vmem>>, %arg3: memref<48x128xf32, #tpu.memory_space<vmem>>, %arg4: memref<1x128xf32, #tpu.memory_space<vmem>>, %arg5: memref<32x128xf32, #tpu.memory_space<vmem>>, %arg6: memref<1x128xf32, #tpu.memory_space<vmem>>, %arg7: memref<32x16xf32, #tpu.memory_space<vmem>>, %arg8: memref<1x16xf32, #tpu.memory_space<vmem>>, %arg9: memref<8x16xf32, #tpu.memory_space<vmem>>, %arg10: memref<8x32xf32, #tpu.memory_space<vmem>>, %arg11: memref<8x32xf32, #tpu.memory_space<vmem>>) attributes {dimension_semantics = [], scalar_prefetch = 0 : i64, scratch_operands = 0 : i64, tpu.core_type = #tpu.core_type<tc>} {
    %0 = tpu.iota {dimensions = array<i32: 1>} : vector<8x128xi32>
    %c64_i32 = arith.constant 64 : i32
    %1 = vector.broadcast %c64_i32 : i32 to vector<8x128xi32>
    %2 = arith.cmpi sge, %0, %1 : vector<8x128xi32>
    %c96_i32 = arith.constant 96 : i32
    %3 = vector.broadcast %c96_i32 : i32 to vector<8x128xi32>
    %4 = arith.cmpi slt, %0, %3 : vector<8x128xi32>
    %5 = arith.andi %2, %4 : vector<8x128xi1>
    %c0 = arith.constant 0 : index
    %c0_0 = arith.constant 0 : index
    %6 = vector.load %arg7[%c0, %c0_0] : memref<32x16xf32, #tpu.memory_space<vmem>>, vector<32x16xf32>
    %c0_1 = arith.constant 0 : index
    %c0_2 = arith.constant 0 : index
    %7 = vector.load %arg8[%c0_1, %c0_2] : memref<1x16xf32, #tpu.memory_space<vmem>>, vector<1x16xf32>
    %c0_3 = arith.constant 0 : index
    %c0_4 = arith.constant 0 : index
    %8 = vector.load %arg1[%c0_3, %c0_4] : memref<8x32xf32, #tpu.memory_space<vmem>>, vector<8x32xf32>
    %c0_5 = arith.constant 0 : index
    %c0_6 = arith.constant 0 : index
    %9 = vector.load %arg2[%c0_5, %c0_6] : memref<8x32xf32, #tpu.memory_space<vmem>>, vector<8x32xf32>
    %c0_7 = arith.constant 0 : index
    %c0_8 = arith.constant 0 : index
    %10 = vector.load %arg0[%c0_7, %c0_8] : memref<8x16xf32, #tpu.memory_space<vmem>>, vector<8x16xf32>
    %c0_9 = arith.constant 0 : index
    %c0_10 = arith.constant 0 : index
    %11 = vector.load %arg3[%c0_9, %c0_10] : memref<48x128xf32, #tpu.memory_space<vmem>>, vector<16x128xf32>
    %cst = arith.constant dense<0.000000e+00> : vector<8x128xf32>
    %12 = tpu.matmul %10, %11, %cst {dimension_numbers = #tpu.dot_dimension_numbers<[1], [0], [0], [1], [0, 0, 1, 1], [], []>} : vector<8x16xf32>, vector<16x128xf32>, vector<8x128xf32> -> vector<8x128xf32>
    %c16 = arith.constant 16 : index
    %c0_11 = arith.constant 0 : index
    %13 = vector.load %arg3[%c16, %c0_11] : memref<48x128xf32, #tpu.memory_space<vmem>>, vector<32x128xf32>
    %cst_12 = arith.constant dense<0.000000e+00> : vector<8x128xf32>
    %14 = tpu.matmul %8, %13, %cst_12 {dimension_numbers = #tpu.dot_dimension_numbers<[1], [0], [0], [1], [0, 0, 1, 1], [], []>} : vector<8x32xf32>, vector<32x128xf32>, vector<8x128xf32> -> vector<8x128xf32>
    %15 = arith.addf %12, %14 : vector<8x128xf32>
    %c0_13 = arith.constant 0 : index
    %c0_14 = arith.constant 0 : index
    %16 = vector.load %arg4[%c0_13, %c0_14] : memref<1x128xf32, #tpu.memory_space<vmem>>, vector<1x128xf32>
    %17 = vector.broadcast %16 : vector<1x128xf32> to vector<8x128xf32>
    %18 = arith.addf %15, %17 : vector<8x128xf32>
    %19 = math.tanh %18 : vector<8x128xf32>
    %cst_15 = arith.constant 5.000000e-01 : f32
    %20 = vector.broadcast %cst_15 : f32 to vector<8x128xf32>
    %21 = arith.mulf %20, %19 : vector<8x128xf32>
    %cst_16 = arith.constant 5.000000e-01 : f32
    %22 = vector.broadcast %cst_16 : f32 to vector<8x128xf32>
    %23 = arith.addf %21, %22 : vector<8x128xf32>
    %24 = arith.select %5, %19, %23 : vector<8x128xi1>, vector<8x128xf32>
    %25 = vector.extract_strided_slice %24 {offsets = [0, 0], sizes = [8, 32], strides = [1, 1]} : vector<8x128xf32> to vector<8x32xf32>
    %26 = vector.extract_strided_slice %24 {offsets = [0, 32], sizes = [8, 32], strides = [1, 1]} : vector<8x128xf32> to vector<8x32xf32>
    %27 = vector.extract_strided_slice %24 {offsets = [0, 64], sizes = [8, 32], strides = [1, 1]} : vector<8x128xf32> to vector<8x32xf32>
    %28 = vector.extract_strided_slice %24 {offsets = [0, 96], sizes = [8, 32], strides = [1, 1]} : vector<8x128xf32> to vector<8x32xf32>
    %29 = arith.mulf %26, %9 : vector<8x32xf32>
    %30 = arith.mulf %25, %27 : vector<8x32xf32>
    %31 = arith.addf %29, %30 : vector<8x32xf32>
    %32 = math.tanh %31 : vector<8x32xf32>
    %33 = arith.mulf %28, %32 : vector<8x32xf32>
    %cst_17 = arith.constant dense<0.000000e+00> : vector<8x16xf32>
    %34 = tpu.matmul %33, %6, %cst_17 {dimension_numbers = #tpu.dot_dimension_numbers<[1], [0], [0], [1], [0, 0, 1, 1], [], []>} : vector<8x32xf32>, vector<32x16xf32>, vector<8x16xf32> -> vector<8x16xf32>
    %35 = vector.broadcast %7 : vector<1x16xf32> to vector<8x16xf32>
    %36 = arith.addf %34, %35 : vector<8x16xf32>
    %c0_18 = arith.constant 0 : index
    %c0_19 = arith.constant 0 : index
    %37 = vector.load %arg9[%c0_18, %c0_19] : memref<8x16xf32, #tpu.memory_space<vmem>>, vector<8x16xf32>
    tpu.vector_store %arg9[%c0_18, %c0_19], %36 {strides = array<i32>} : memref<8x16xf32, #tpu.memory_space<vmem>>, vector<8x16xf32>,
    %c0_20 = arith.constant 0 : index
    %c0_21 = arith.constant 0 : index
    %38 = vector.load %arg10[%c0_20, %c0_21] : memref<8x32xf32, #tpu.memory_space<vmem>>, vector<8x32xf32>
    tpu.vector_store %arg10[%c0_20, %c0_21], %33 {strides = array<i32>} : memref<8x32xf32, #tpu.memory_space<vmem>>, vector<8x32xf32>,
    %c0_22 = arith.constant 0 : index
    %c0_23 = arith.constant 0 : index
    %39 = vector.load %arg11[%c0_22, %c0_23] : memref<8x32xf32, #tpu.memory_space<vmem>>, vector<8x32xf32>
    tpu.vector_store %arg11[%c0_22, %c0_23], %31 {strides = array<i32>} : memref<8x32xf32, #tpu.memory_space<vmem>>, vector<8x32xf32>,
    return
  }
}

</mosaic_0001>

<llo_original>
// kernel: tpu_custom_call.1
$region0: #{tpu_custom_call.1}
  #allocation0 [shape = 'u32[]', space=smem, size = 0x4, offset = 0x4, fixed_abs, tag = 'smem constant byte address 0x4 - core index']
  #allocation1 [shape = 'u32[72,128]{1,0:T(1,128)}', space=vmem, size = 0x9000, scoped, tag = 'internal scratch']
  %s0 = inlined_call_operand.hbm [shape: f32[8,16], index: 0, kind: input, shape index: {}]
  %s1 = inlined_call_operand.hbm [shape: f32[8,32], index: 1, kind: input, shape index: {}]
  %s2 = inlined_call_operand.hbm [shape: f32[8,32], index: 2, kind: input, shape index: {}]
  %s3 = inlined_call_operand.vmem [shape: f32[48,128], index: 3, kind: input, shape index: {}]
  %s4 = inlined_call_operand.vmem [shape: f32[1,128], index: 4, kind: input, shape index: {}]
  %s5 = inlined_call_operand.hbm [shape: f32[32,128], index: 5, kind: input, shape index: {}]
  %s6 = inlined_call_operand.vmem [shape: f32[1,128], index: 6, kind: input, shape index: {}]
  %s7 = inlined_call_operand.vmem [shape: f32[32,16], index: 7, kind: input, shape index: {}]
  %s8 = inlined_call_operand.vmem [shape: f32[1,16], index: 8, kind: input, shape index: {}]
  %s9 = inlined_call_operand.hbm [shape: f32[8,16], index: 9, kind: output, shape index: {0}]
  %s10 = inlined_call_operand.hbm [shape: f32[8,32], index: 10, kind: output, shape index: {1}]
  %s11 = inlined_call_operand.hbm [shape: f32[8,32], index: 11, kind: output, shape index: {2}]
  %12 = xla_tuple %s9, %s10, %s11
  %s13 = sld [smem:[#allocation0]]
  $region78: #{tpu_custom_call.1} parent=0
    _
  %s15 = ssub.s32 1, %s13
  %s16 = scalar_select 0, %s15, %s13
  $region1: #{tpu_custom_call.1} parent=0
    #allocation2 [shape = 'u8[4096]{0}', space=vmem, size = 0x1000, scoped, tag = 'input window, operand 0, single buffered']
    #allocation3 [shape = 's32[1]{0}', space=sflag, size = 0x4, scoped, tag = 'scoped memory for tpu_custom_call.1']
    #allocation4 [shape = 's32[1]{0}', space=sflag, size = 0x4, scoped, tag = 'scoped memory for tpu_custom_call.1']
    #allocation5 [shape = 'u8[4096]{0}', space=vmem, size = 0x1000, scoped, tag = 'input window, operand 1, single buffered']
    #allocation6 [shape = 's32[1]{0}', space=sflag, size = 0x4, scoped, tag = 'scoped memory for tpu_custom_call.1']
    #allocation7 [shape = 'u8[4096]{0}', space=vmem, size = 0x1000, scoped, tag = 'input window, operand 2, single buffered']
    #allocation8 [shape = 'u8[16384]{0}', space=vmem, size = 0x4000, scoped, tag = 'input window, operand 5, single buffered']
    #allocation9 [shape = 's32[1]{0}', space=sflag, size = 0x4, scoped, tag = 'scoped memory for tpu_custom_call.1']
    #allocation10 [shape = 'u8[4096]{0}', space=vmem, size = 0x1000, scoped, tag = 'output window, operand 0, single buffered']
    #allocation11 [shape = 'u8[4096]{0}', space=vmem, size = 0x1000, scoped, tag = 'output window, operand 1, single buffered']
    #allocation12 [shape = 's32[1]{0}', space=sflag, size = 0x4, scoped, tag = 'scoped memory for tpu_custom_call.1']
    #allocation13 [shape = 'u8[4096]{0}', space=vmem, size = 0x1000, scoped, tag = 'output window, operand 2, single buffered']
    %17 = vsyncpa [#allocation3], 0
    %18 = vsyncpa [#allocation6], 0
    %19 = vsyncpa [#allocation9], 0
    %20 = vsyncpa [#allocation4], 0
    %21 = vsyncpa [#allocation12], 0
    // Predicated region
    $region2: #{tpu_custom_call.1} parent=1 // pred_check
      _
    $region3: #{tpu_custom_call.1} parent=1 // pred_check_branch
      %23 = sbr.rel (0) target = $region5
    $region4: #{tpu_custom_call.1} parent=1 // pred_region
      %25 = vsyncadd [#allocation3], 0
      %s27 = sshll.u32 %s0, 4
      %s28 = int_to_ptr.hbm [resolvable:$true] %s27
      %s29 = sshll.u32 [#allocation2], 4
      %s30 = int_to_ptr.vmem [resolvable:$true] %s29
      %32 = dma.hbm_to_vmem [thread:$0]  %s28, 128, %s30, [#allocation3]
    $region5: #{tpu_custom_call.1} parent=1 // pred_fallthru
      _
    // Predicated region
    $region6: #{tpu_custom_call.1} parent=1 // pred_check
      _
    $region7: #{tpu_custom_call.1} parent=1 // pred_check_branch
      %34 = sbr.rel (0) target = $region9
    $region8: #{tpu_custom_call.1} parent=1 // pred_region
      %36 = vsyncadd [#allocation6], 0
      %s38 = sshll.u32 %s1, 4
      %s39 = int_to_ptr.hbm [resolvable:$true] %s38
      %s40 = sshll.u32 [#allocation5], 4
      %s41 = int_to_ptr.vmem [resolvable:$true] %s40
      %43 = dma.hbm_to_vmem [thread:$0]  %s39, 128, %s41, [#allocation6]
    $region9: #{tpu_custom_call.1} parent=1 // pred_fallthru
      _
    // Predicated region
    $region10: #{tpu_custom_call.1} parent=1 // pred_check
      _
    $region11: #{tpu_custom_call.1} parent=1 // pred_check_branch
      %45 = sbr.rel (0) target = $region13
    $region12: #{tpu_custom_call.1} parent=1 // pred_region
      %47 = vsyncadd [#allocation6], 0
      %s49 = sshll.u32 %s2, 4
      %s50 = int_to_ptr.hbm [resolvable:$true] %s49
      %s51 = sshll.u32 [#allocation7], 4
      %s52 = int_to_ptr.vmem [resolvable:$true] %s51
      %54 = dma.hbm_to_vmem [thread:$0]  %s50, 128, %s52, [#allocation6]
    $region13: #{tpu_custom_call.1} parent=1 // pred_fallthru
      _
    // Predicated region
    $region14: #{tpu_custom_call.1} parent=1 // pred_check
      _
    $region15: #{tpu_custom_call.1} parent=1 // pred_check_branch
      %56 = sbr.rel (0) target = $region17
    $region16: #{tpu_custom_call.1} parent=1 // pred_region
      _
    $region17: #{tpu_custom_call.1} parent=1 // pred_fallthru
      _
    // Predicated region
    $region18: #{tpu_custom_call.1} parent=1 // pred_check
      _
    $region19: #{tpu_custom_call.1} parent=1 // pred_check_branch
      %58 = sbr.rel (0) target = $region21
    $region20: #{tpu_custom_call.1} parent=1 // pred_region
      _
    $region21: #{tpu_custom_call.1} parent=1 // pred_fallthru
      _
    // Predicated region
    $region22: #{tpu_custom_call.1} parent=1 // pred_check
      _
    $region23: #{tpu_custom_call.1} parent=1 // pred_check_branch
      %60 = sbr.rel (0) target = $region25
    $region24: #{tpu_custom_call.1} parent=1 // pred_region
      %62 = vsyncadd [#allocation9], 0
      %s63 = sshll.u32 %s5, 4
      %s64 = int_to_ptr.hbm [resolvable:$true] %s63
      %s65 = sshll.u32 [#allocation8], 4
      %s66 = int_to_ptr.vmem [resolvable:$true] %s65
      %71 = dma.hbm_to_vmem [thread:$0]  %s64, 512, %s66, [#allocation9], 128, 128, 8
    $region25: #{tpu_custom_call.1} parent=1 // pred_fallthru
      _
    // Predicated region
    $region26: #{tpu_custom_call.1} parent=1 // pred_check
      _
    $region27: #{tpu_custom_call.1} parent=1 // pred_check_branch
      %73 = sbr.rel (0) target = $region29
    $region28: #{tpu_custom_call.1} parent=1 // pred_region
      _
    $region29: #{tpu_custom_call.1} parent=1 // pred_fallthru
      _
    // Predicated region
    $region30: #{tpu_custom_call.1} parent=1 // pred_check
      _
    $region31: #{tpu_custom_call.1} parent=1 // pred_check_branch
      %75 = sbr.rel (0) target = $region33
    $region32: #{tpu_custom_call.1} parent=1 // pred_region
      _
    $region33: #{tpu_custom_call.1} parent=1 // pred_fallthru
      _
    // Predicated region
    $region34: #{tpu_custom_call.1} parent=1 // pred_check
      _
    $region35: #{tpu_custom_call.1} parent=1 // pred_check_branch
      %77 = sbr.rel (0) target = $region37
    $region36: #{tpu_custom_call.1} parent=1 // pred_region
      _
    $region37: #{tpu_custom_call.1} parent=1 // pred_fallthru
      _
    // Predicated region
    $region38: #{tpu_custom_call.1} parent=1 // pred_check
      _
    $region39: #{tpu_custom_call.1} parent=1 // pred_check_branch
      %79 = sbr.rel (0) target = $region41
    $region40: #{tpu_custom_call.1} parent=1 // pred_region
      %81 = dma.done [#allocation3], 128
    $region41: #{tpu_custom_call.1} parent=1 // pred_fallthru
      _
    // Predicated region
    $region42: #{tpu_custom_call.1} parent=1 // pred_check
      _
    $region43: #{tpu_custom_call.1} parent=1 // pred_check_branch
      %83 = sbr.rel (0) target = $region45
    $region44: #{tpu_custom_call.1} parent=1 // pred_region
      %85 = dma.done [#allocation6], 128
    $region45: #{tpu_custom_call.1} parent=1 // pred_fallthru
      _
    // Predicated region
    $region46: #{tpu_custom_call.1} parent=1 // pred_check
      _
    $region47: #{tpu_custom_call.1} parent=1 // pred_check_branch
      %87 = sbr.rel (0) target = $region49
    $region48: #{tpu_custom_call.1} parent=1 // pred_region
      %89 = dma.done [#allocation6], 128
    $region49: #{tpu_custom_call.1} parent=1 // pred_fallthru
      _
    // Predicated region
    $region50: #{tpu_custom_call.1} parent=1 // pred_check
      _
    $region51: #{tpu_custom_call.1} parent=1 // pred_check_branch
      %91 = sbr.rel (0) target = $region53
    $region52: #{tpu_custom_call.1} parent=1 // pred_region
      %93 = dma.done [#allocation9], 512
    $region53: #{tpu_custom_call.1} parent=1 // pred_fallthru
      _
    %v94 = vlaneseq
    %v95 = vand.u32 %v94, 127
    %vm96 = vcmp.ge.s32.totalorder %v95, 64
    %vm97 = vcmp.lt.s32.totalorder %v95, 96
    %vm98 = vmand %vm96, %vm97
    %v99 = vld [vmem:[%s7] sm:$0xff]
    %v100 = vld [vmem:[%s7 + $0x8] sm:$0xff]
    %v101 = vld [vmem:[%s7 + $0x10] sm:$0xff]
    %v102 = vld [vmem:[%s7 + $0x18] sm:$0xff]
    %v103 = vld [vmem:[%s8] sm:$0x1]
    %v104 = vld [vmem:[#allocation5] sm:$0xff]
    %v105 = vld [vmem:[#allocation7] sm:$0xff]
    %v106 = vld [vmem:[#allocation2] sm:$0xff]
    %v107 = vld [vmem:[%s3] sm:$0xff]
    %v108 = vld [vmem:[%s3 + $0x8] sm:$0xff]
    %v109 = vld [vmem:[%s3 + $0x10] sm:$0xff]
    %v110 = vld [vmem:[%s3 + $0x18] sm:$0xff]
    %v111 = vld [vmem:[%s3 + $0x20] sm:$0xff]
    %v112 = vld [vmem:[%s3 + $0x28] sm:$0xff]
    %vm113 = vcmask 261120
    %v115 = vsel %vm113, %v104, 0
    %117 = vmatpush.msra.mxu0 0.0
    %118 = vmatpush.msra.mxu0 0.0
    %119 = vmatpush.msra.mxu0 0.0
    %120 = vmatpush.msra.mxu0 0.0
    %121 = vmatpush.msra.mxu0 0.0
    %122 = vmatpush.msra.mxu0 0.0
    %123 = vmatpush.msra.mxu0 0.0
    %124 = vmatpush.msra.mxu0 0.0
    %125 = vmatpush.msra.mxu0 0.0
    %126 = vmatpush.msra.mxu0 0.0
    %127 = vmatpush.msra.mxu0 0.0
    %128 = vmatpush.msra.mxu0 0.0
    %129 = vmatpush.msra.mxu0 %v112
    %130 = vmatpush.msra.mxu0 %v111
    %131 = vmatpush.msra.mxu0 %v110
    %132 = vmatpush.msra.mxu0 %v109
    %133 = vmatmul.f32.gmra.mxu0 %v115
    %v134 = vpop.f32.mrf.mxu0
    %v135 = vadd.f32 0.0, %v134
    %136 = vdwg.mxu0
    %vm137 = vcmask 130048
    %v139 = vsel %vm137, %v106, 0
    %141 = vmatpush.msra.mxu0 0.0
    %142 = vmatpush.msra.mxu0 0.0
    %143 = vmatpush.msra.mxu0 0.0
    %144 = vmatpush.msra.mxu0 0.0
    %145 = vmatpush.msra.mxu0 0.0
    %146 = vmatpush.msra.mxu0 0.0
    %147 = vmatpush.msra.mxu0 0.0
    %148 = vmatpush.msra.mxu0 0.0
    %149 = vmatpush.msra.mxu0 0.0
    %150 = vmatpush.msra.mxu0 0.0
    %151 = vmatpush.msra.mxu0 0.0
    %152 = vmatpush.msra.mxu0 0.0
    %153 = vmatpush.msra.mxu0 0.0
    %154 = vmatpush.msra.mxu0 0.0
    %155 = vmatpush.msra.mxu0 %v108
    %156 = vmatpush.msra.mxu0 %v107
    %157 = vmatmul.f32.gmra.mxu0 %v139
    %v158 = vpop.f32.mrf.mxu0
    %v159 = vadd.f32 %v135, %v158
    %160 = vdwg.mxu0
    %v161 = vld [vmem:[%s4] sm:$0x1]
    %v163 = vperm.slane %v161, 0
    %v165 = vadd.f32 %v159, %v163
    %v166 = vtanh.pop %v165
    %v167 = vmul.f32 %v166, 0.5
    %v168 = vadd.f32 %v167, 0.5
    %v169 = vsel %vm98, %v166, %v168
    %171 = vrot.lane.b32.xlu0 %v105, 32
    %v172 = vpop.permute.xlu0 %171
    %v174 = vmul.f32 %v169, %v172
    %176 = vrot.lane.b32.xlu0 %v169, 64
    %v177 = vpop.permute.xlu0 %176
    %v179 = vmul.f32 %v169, %v177
    %181 = vrot.lane.b32.xlu0 %v179, 32
    %v182 = vpop.permute.xlu0 %181
    %v184 = vadd.f32 %v174, %v182
    %v185 = vtanh.pop %v184
    %187 = vrot.lane.b32.xlu0 %v185, 64
    %v188 = vpop.permute.xlu0 %187
    %v190 = vmul.f32 %v169, %v188
    %v192 = vperm.slane %v103, 0
    %195 = vrot.lane.b32.xlu0 %v190, 32
    %v196 = vpop.permute.xlu0 %195
    %v197 = vsel %vm113, %v196, 0
    %199 = vmatpush.msra.mxu0 0.0
    %200 = vmatpush.msra.mxu0 0.0
    %201 = vmatpush.msra.mxu0 0.0
    %202 = vmatpush.msra.mxu0 0.0
    %203 = vmatpush.msra.mxu0 0.0
    %204 = vmatpush.msra.mxu0 0.0
    %205 = vmatpush.msra.mxu0 0.0
    %206 = vmatpush.msra.mxu0 0.0
    %207 = vmatpush.msra.mxu0 0.0
    %208 = vmatpush.msra.mxu0 0.0
    %209 = vmatpush.msra.mxu0 0.0
    %210 = vmatpush.msra.mxu0 0.0
    %211 = vmatpush.msra.mxu0 %v102
    %212 = vmatpush.msra.mxu0 %v101
    %213 = vmatpush.msra.mxu0 %v100
    %214 = vmatpush.msra.mxu0 %v99
    %215 = vmatmul.f32.gmra.mxu0 %v197
    %v216 = vpop.f32.mrf.mxu0
    %v217 = vadd.f32 %v192, %v216
    %218 = vdwg.mxu0
    %219 = vst.msk [vmem:[#allocation10] sm:$0xff] %vm137, %v217
    %221 = vst.msk [vmem:[#allocation11] sm:$0xff] %vm113, %v196
    %223 = vrot.lane.b32.xlu0 %v184, 96
    %v224 = vpop.permute.xlu0 %223
    %226 = vst.msk [vmem:[#allocation13] sm:$0xff] %vm113, %v224
    // Predicated region
    $region54: #{tpu_custom_call.1} parent=1 // pred_check
      _
    $region55: #{tpu_custom_call.1} parent=1 // pred_check_branch
      %228 = sbr.rel (0) target = $region57
    $region56: #{tpu_custom_call.1} parent=1 // pred_region
      %230 = vsyncadd [#allocation4], 0
      %s232 = sshll.u32 [#allocation10], 4
      %s233 = int_to_ptr.vmem [resolvable:$true] %s232
      %s234 = sshll.u32 %s9, 4
      %s235 = int_to_ptr.hbm [resolvable:$true] %s234
      %237 = dma.vmem_to_hbm [thread:$0]  %s233, 128, %s235, [#allocation4]
    $region57: #{tpu_custom_call.1} parent=1 // pred_fallthru
      _
    // Predicated region
    $region58: #{tpu_custom_call.1} parent=1 // pred_check
      _
    $region59: #{tpu_custom_call.1} parent=1 // pred_check_branch
      %239 = sbr.rel (0) target = $region61
    $region60: #{tpu_custom_call.1} parent=1 // pred_region
      %241 = vsyncadd [#allocation12], 0
      %s243 = sshll.u32 [#allocation11], 4
      %s244 = int_to_ptr.vmem [resolvable:$true] %s243
      %s245 = sshll.u32 %s10, 4
      %s246 = int_to_ptr.hbm [resolvable:$true] %s245
      %248 = dma.vmem_to_hbm [thread:$0]  %s244, 128, %s246, [#allocation12]
    $region61: #{tpu_custom_call.1} parent=1 // pred_fallthru
      _
    // Predicated region
    $region62: #{tpu_custom_call.1} parent=1 // pred_check
      _
    $region63: #{tpu_custom_call.1} parent=1 // pred_check_branch
      %250 = sbr.rel (0) target = $region65
    $region64: #{tpu_custom_call.1} parent=1 // pred_region
      %252 = vsyncadd [#allocation12], 0
      %s254 = sshll.u32 [#allocation13], 4
      %s255 = int_to_ptr.vmem [resolvable:$true] %s254
      %s256 = sshll.u32 %s11, 4
      %s257 = int_to_ptr.hbm [resolvable:$true] %s256
      %259 = dma.vmem_to_hbm [thread:$0]  %s255, 128, %s257, [#allocation12]
    $region65: #{tpu_custom_call.1} parent=1 // pred_fallthru
      _
    // Predicated region
    $region66: #{tpu_custom_call.1} parent=1 // pred_check
      _
    $region67: #{tpu_custom_call.1} parent=1 // pred_check_branch
      %261 = sbr.rel (0) target = $region69
    $region68: #{tpu_custom_call.1} parent=1 // pred_region
      %263 = dma.done [#allocation4], 128
    $region69: #{tpu_custom_call.1} parent=1 // pred_fallthru
      _
    // Predicated region
    $region70: #{tpu_custom_call.1} parent=1 // pred_check
      _
    $region71: #{tpu_custom_call.1} parent=1 // pred_check_branch
      %265 = sbr.rel (0) target = $region73
    $region72: #{tpu_custom_call.1} parent=1 // pred_region
      %267 = dma.done [#allocation12], 128
    $region73: #{tpu_custom_call.1} parent=1 // pred_fallthru
      _
    // Predicated region
    $region74: #{tpu_custom_call.1} parent=1 // pred_check
      _
    $region75: #{tpu_custom_call.1} parent=1 // pred_check_branch
      %269 = sbr.rel (0) target = $region77
    $region76: #{tpu_custom_call.1} parent=1 // pred_region
      %271 = dma.done [#allocation12], 128
    $region77: #{tpu_custom_call.1} parent=1 // pred_fallthru
      _
    %272 = vsyncpa [#allocation3], 1
    %273 = vsyncpa [#allocation6], 1
    %274 = vsyncpa [#allocation9], 1
    %275 = vsyncpa [#allocation4], 1
    %276 = vsyncpa [#allocation12], 1

</llo_original>
